<compile_context>
chip_gen: v5e
topology: v5e:2x2
jax: 0.10.0
libtpu: 0.0.40
codegen_flags: <defaults>
</compile_context>

<pallas_src>
import functools

import numpy as np
import jax
import jax.numpy as jnp
from jax.experimental import pallas as pl
from jax.experimental.pallas import tpu as pltpu

EPS = 1e-5
NEG_SLOPE = 0.01


def _round_up(x, m):
    return (x + m - 1) // m * m


def _leaky_relu(x):
    return jnp.where(x > 0, x, NEG_SLOPE * x)


# ---------------------------------------------------------------------------
# Shared per-row forward: BN(x) -> fc1 -> leaky -> [., a] fc2 -> leaky -> fc3.
# All math in f32; MXU operands in `compute_dtype` with f32 accumulation.
# ---------------------------------------------------------------------------
def _forward_rows(x, a, mean, var, gamma, beta,
                  w1, b1, w2h, w2a, b2, w3row, b3, compute_dtype):
    scale = gamma * jax.lax.rsqrt(var + EPS)          # (1, S)
    shift = beta - mean * scale                       # (1, S)
    xn = x * scale + shift                            # (rows, S)  f32

    hs = jnp.dot(xn.astype(compute_dtype), w1,
                 preferred_element_type=jnp.float32) + b1
    hs = _leaky_relu(hs)                              # (rows, H1P)

    # concat([hs, a]) @ W2  ==  hs @ W2h + a @ W2a.  The tiny-K action part is
    # one MXU dot instead of A unrolled VPU broadcast-FMAs (which would cost
    # ~2k VALU cycles/tile at tile_b=8192); it hides under the states DMA.
    h2 = (jnp.dot(hs.astype(compute_dtype), w2h, preferred_element_type=jnp.float32)
          + jnp.dot(a.astype(compute_dtype), w2a, preferred_element_type=jnp.float32)
          + b2)
    h2 = _leaky_relu(h2)                              # (rows, H2P)

    # fc3 (N=1): VPU multiply + lane reduction instead of an MXU matmul.
    return jnp.sum(h2 * w3row, axis=1, keepdims=True) + b3


# ---------------------------------------------------------------------------
# Fused single-pass kernel (whole batch resident in VMEM): BN stats + forward.
# States are read from HBM exactly once; no wrapper-level XLA ops at all.
# ---------------------------------------------------------------------------
def critic_fused_kernel(states_ref, actions_ref, gamma_ref, beta_ref,
                        w1_ref, b1_ref, w2h_ref, w2a_ref, b2_ref,
                        w3_ref, b3_ref, out_ref, *, compute_dtype):
    x = states_ref[...].astype(jnp.float32)           # (B, S)
    a = actions_ref[...]                               # (B, A)
    # Exact two-pass, full-batch, biased variance (BatchNorm train mode).
    mean = jnp.mean(x, axis=0, keepdims=True)
    var = jnp.mean((x - mean) ** 2, axis=0, keepdims=True)
    q = _forward_rows(x, a, mean, var, gamma_ref[...], beta_ref[...],
                      w1_ref[...], b1_ref[...], w2h_ref[...], w2a_ref[...],
                      b2_ref[...], w3_ref[...], b3_ref[0, 0], compute_dtype)
    out_ref[...] = q.astype(out_ref.dtype)


# ---------------------------------------------------------------------------
# Tiled path, phase 1: per-tile partial (sum, M2) for BatchNorm statistics.
# Per-tile two-pass (deviation from the tile mean) + Chan combine in the
# wrapper avoids the E[x^2] - mean^2 cancellation.  "parallel" semantics so
# v7x's second TensorCore can take half the tiles.
# ---------------------------------------------------------------------------
def bn_stats_kernel(states_ref, sum_ref, m2_ref, *, total_rows, tile_rows):
    i = pl.program_id(0)
    x = states_ref[...].astype(jnp.float32)            # (tile_rows, S)
    row = jax.lax.broadcasted_iota(jnp.int32, x.shape, 0) + i * tile_rows
    valid = row < total_rows                           # mask partial last tile
    x = jnp.where(valid, x, 0.0)
    cnt = jnp.minimum(total_rows - i * tile_rows, tile_rows).astype(jnp.float32)
    s = jnp.sum(x, axis=0, keepdims=True)              # (1, S)
    mean_t = s / cnt
    dev = jnp.where(valid, x - mean_t, 0.0)
    m2 = jnp.sum(dev * dev, axis=0, keepdims=True)     # (1, S)
    sum_ref[...] = s[None]                             # (1, 1, S)
    m2_ref[...] = m2[None]


# ---------------------------------------------------------------------------
# Tiled path, phase 2: BN (applied in-kernel from mean/var/gamma/beta) + MLP
# over one batch tile.  Weights/stats use constant index maps -> DMA'd once,
# VMEM-resident across the grid.
# ---------------------------------------------------------------------------
def critic_tile_kernel(states_ref, actions_ref, mean_ref, var_ref,
                       gamma_ref, beta_ref, w1_ref, b1_ref,
                       w2h_ref, w2a_ref, b2_ref, w3_ref, b3_ref,
                       out_ref, *, compute_dtype):
    x = states_ref[...].astype(jnp.float32)
    a = actions_ref[...]
    q = _forward_rows(x, a, mean_ref[...], var_ref[...], gamma_ref[...],
                      beta_ref[...], w1_ref[...], b1_ref[...],
                      w2h_ref[...], w2a_ref[...], b2_ref[...],
                      w3_ref[...], b3_ref[0, 0], compute_dtype)
    out_ref[...] = q.astype(out_ref.dtype)


# ---------------------------------------------------------------------------
# Wrapper
# ---------------------------------------------------------------------------
def critic_forward(states, actions, params, *, tile_b=8192, fused_max_rows=4096,
                   compute_dtype=jnp.float32):
    # Mirror the torch forward's states.unsqueeze(0) for 1-D inputs.
    if states.ndim == 1:
        states = states[None, :]
    if actions.ndim == 1:
        actions = actions[None, :]

    B, S = states.shape
    A = actions.shape[1]
    H1P = params["w1"].shape[1]
    H2P = params["w2h"].shape[1]

    # For the real HBM saving pass bf16 states/actions from the producer;
    # these casts are no-ops in that case.
    states = states.astype(compute_dtype)
    actions = actions.astype(compute_dtype)
    w1 = params["w1"].astype(compute_dtype)
    w2h = params["w2h"].astype(compute_dtype)
    w2a = params["w2a"].astype(compute_dtype)
    gamma, beta = params["gamma"], params["beta"]
    b1, b2 = params["b1"], params["b2"]
    w3row, b3 = params["w3row"], params["b3"]

    smem = pl.BlockSpec(memory_space=pltpu.MemorySpace.SMEM)

    # ---------------- Fused single-pass path (whole batch in VMEM) ----------
    if B <= fused_max_rows:
        full2 = lambda shape: pl.BlockSpec(shape, lambda i: (0, 0))
        return pl.pallas_call(
            functools.partial(critic_fused_kernel, compute_dtype=compute_dtype),
            out_shape=jax.ShapeDtypeStruct((B, 1), jnp.float32),
            grid=(1,),
            in_specs=[
                full2((B, S)), full2((B, A)),
                full2((1, S)), full2((1, S)),
                full2((S, H1P)), full2((1, H1P)),
                full2((H1P, H2P)), full2((A, H2P)), full2((1, H2P)),
                full2((1, H2P)), smem,
            ],
            out_specs=full2((B, 1)),
            compiler_params=pltpu.CompilerParams(
                dimension_semantics=("arbitrary",)),
        )(states, actions, gamma, beta, w1, b1, w2h, w2a, b2, w3row, b3)

    # ---------------- Tiled two-pass path (large batches) -------------------
    tile_b = min(tile_b, _round_up(B, 8))
    nt = pl.cdiv(B, tile_b)
    grid = (nt,)

    # Phase 1: per-tile partial statistics (parallel over tiles).
    psum, pm2 = pl.pallas_call(
        functools.partial(bn_stats_kernel, total_rows=B, tile_rows=tile_b),
        out_shape=(jax.ShapeDtypeStruct((nt, 1, S), jnp.float32),
                   jax.ShapeDtypeStruct((nt, 1, S), jnp.float32)),
        grid=grid,
        in_specs=[pl.BlockSpec((tile_b, S), lambda i: (i, 0))],
        out_specs=(pl.BlockSpec((1, 1, S), lambda i: (i, 0, 0)),
                   pl.BlockSpec((1, 1, S), lambda i: (i, 0, 0))),
        compiler_params=pltpu.CompilerParams(
            dimension_semantics=("parallel",)),
    )(states)

    # Chan's parallel-variance combine: O(num_tiles * S), negligible next to
    # the O(B * S) phase-2 pass (only used when B > fused_max_rows).
    counts = np.minimum(tile_b, B - tile_b * np.arange(nt)).astype(np.float32)
    cnt = jnp.asarray(counts).reshape(nt, 1)
    psum2 = psum[:, 0, :]                              # (nt, S)
    pm2_2 = pm2[:, 0, :]                               # (nt, S)
    mean = jnp.sum(psum2, axis=0, keepdims=True) / B   # (1, S)
    m2 = (jnp.sum(pm2_2, axis=0, keepdims=True)
          + jnp.sum(cnt * (psum2 / cnt - mean) ** 2, axis=0, keepdims=True))
    var = m2 / B                                       # biased (BN train mode)

    const2 = lambda i: (0, 0)                          # resident small operands
    return pl.pallas_call(
        functools.partial(critic_tile_kernel, compute_dtype=compute_dtype),
        out_shape=jax.ShapeDtypeStruct((B, 1), jnp.float32),
        grid=grid,
        in_specs=[
            pl.BlockSpec((tile_b, S), lambda i: (i, 0)),   # states tile
            pl.BlockSpec((tile_b, A), lambda i: (i, 0)),   # actions tile
            pl.BlockSpec((1, S), const2),                  # mean
            pl.BlockSpec((1, S), const2),                  # var
            pl.BlockSpec((1, S), const2),                  # gamma
            pl.BlockSpec((1, S), const2),                  # beta
            pl.BlockSpec((S, H1P), const2),                # w1
            pl.BlockSpec((1, H1P), const2),                # b1
            pl.BlockSpec((H1P, H2P), const2),              # w2 (hs rows)
            pl.BlockSpec((A, H2P), const2),                # w2 (action rows)
            pl.BlockSpec((1, H2P), const2),                # b2
            pl.BlockSpec((1, H2P), const2),                # w3 as a row
            smem,                                          # b3 scalar
        ],
        out_specs=pl.BlockSpec((tile_b, 1), lambda i: (i, 0)),
        compiler_params=pltpu.CompilerParams(
            dimension_semantics=("parallel",)),            # megacore on v7x
    )(states, actions, mean, var, gamma, beta,
      w1, b1, w2h, w2a, b2, w3row, b3)


# ---------------------------------------------------------------------------
# Parameter init (matches the PyTorch module's reset_parameters / defaults),
# hidden dims zero-padded to the 128-lane width (H1=64->128, H2=32->128) so
# every activation / MXU output occupies full vregs.  S is deliberately NOT
# padded (would only inflate HBM traffic).
# ---------------------------------------------------------------------------
def init_params(key, state_size, action_size, num_agents,
                hidden_in_dim, hidden_out_dim):
    S = state_size * num_agents
    A = action_size * num_agents
    H1, H2 = hidden_in_dim, hidden_out_dim
    H1P = _round_up(H1, 128)
    H2P = _round_up(H2, 128)

    k1, k2, k3, kb1, kb2, kb3 = jax.random.split(key, 6)

    # fc1: weight uniform(+-1/sqrt(H1)) per hidden_init; bias = PyTorch default.
    lim1 = 1.0 / H1 ** 0.5
    w1r = jax.random.uniform(k1, (S, H1), jnp.float32, -lim1, lim1)
    limb1 = 1.0 / S ** 0.5
    b1r = jax.random.uniform(kb1, (1, H1), jnp.float32, -limb1, limb1)

    # fc2: in_features = H1 + A, weight uniform(+-1/sqrt(H2)).
    lim2 = 1.0 / H2 ** 0.5
    w2r = jax.random.uniform(k2, (H1 + A, H2), jnp.float32, -lim2, lim2)
    limb2 = 1.0 / (H1 + A) ** 0.5
    b2r = jax.random.uniform(kb2, (1, H2), jnp.float32, -limb2, limb2)

    # fc3: weight uniform(-0.001, 0.001); bias = PyTorch default.
    w3r = jax.random.uniform(k3, (H2, 1), jnp.float32, -0.001, 0.001)
    limb3 = 1.0 / H2 ** 0.5
    b3 = jax.random.uniform(kb3, (1, 1), jnp.float32, -limb3, limb3)

    # Zero-pad to lane width; padded lanes stay zero end-to-end.
    w1 = jnp.zeros((S, H1P), jnp.float32).at[:, :H1].set(w1r)
    b1 = jnp.zeros((1, H1P), jnp.float32).at[:, :H1].set(b1r)
    w2h = jnp.zeros((H1P, H2P), jnp.float32).at[:H1, :H2].set(w2r[:H1])
    w2a = jnp.zeros((A, H2P), jnp.float32).at[:, :H2].set(w2r[H1:])
    b2 = jnp.zeros((1, H2P), jnp.float32).at[:, :H2].set(b2r)
    w3row = jnp.zeros((1, H2P), jnp.float32).at[:, :H2].set(w3r[:, 0][None, :])

    gamma = jnp.ones((1, S), jnp.float32)      # BatchNorm1d affine init
    beta = jnp.zeros((1, S), jnp.float32)

    return dict(gamma=gamma, beta=beta, w1=w1, b1=b1,
                w2h=w2h, w2a=w2a, b2=b2, w3row=w3row, b3=b3)


if __name__ == "__main__":
    state_size, action_size, num_agents = 24, 2, 2
    hidden_in_dim, hidden_out_dim = 64, 32

    key = jax.random.PRNGKey(0)
    kp, ks, ka = jax.random.split(key, 3)
    params = init_params(kp, state_size, action_size, num_agents,
                         hidden_in_dim, hidden_out_dim)
    S = state_size * num_agents
    A = action_size * num_agents

    # Plain-JAX reference (unpadded math, same as the PyTorch module).
    def ref(s, a, p, H1=hidden_in_dim, H2=hidden_out_dim):
        mean = jnp.mean(s, axis=0, keepdims=True)
        var = jnp.mean((s - mean) ** 2, axis=0, keepdims=True)
        x = (s - mean) * jax.lax.rsqrt(var + EPS) * p["gamma"] + p["beta"]
        hs = jax.nn.leaky_relu(x @ p["w1"][:, :H1] + p["b1"][:, :H1], NEG_SLOPE)
        h1 = jnp.concatenate([hs, a], axis=1)
        w2 = jnp.concatenate([p["w2h"][:H1, :H2], p["w2a"][:, :H2]], axis=0)
        h2 = jax.nn.leaky_relu(h1 @ w2 + p["b2"][:, :H2], NEG_SLOPE)
        return h2 @ p["w3row"][:, :H2].T + p["b3"]

    # --- Test 1: fused single-pass path (small batch, B not a multiple of 8).
    B1 = 50
    s1 = jax.random.normal(ks, (B1, S), jnp.float32)
    a1 = jax.random.uniform(ka, (B1, A), jnp.float32, -1.0, 1.0)
    fwd_fused = jax.jit(lambda s, a: critic_forward(s, a, params))
    out1 = jax.block_until_ready(fwd_fused(s1, a1))
    exp1 = ref(s1, a1, params)
    assert out1.shape == (B1, 1)
    assert jnp.allclose(out1, exp1, atol=2e-5, rtol=1e-4), (
        float(jnp.max(jnp.abs(out1 - exp1))))

    # --- Test 2: tiled two-pass path with a partial final batch tile
    #     (B % tile_b != 0 and B % 8 != 0): exercises the masked stats tile and
    #     the clamped output writeback flagged in the review.
    B2 = 300
    s2 = jax.random.normal(jax.random.fold_in(ks, 1), (B2, S), jnp.float32)
    a2 = jax.random.uniform(jax.random.fold_in(ka, 1), (B2, A), jnp.float32,
                            -1.0, 1.0)
    fwd_tiled = jax.jit(lambda s, a: critic_forward(
        s, a, params, tile_b=128, fused_max_rows=0))
    out2 = jax.block_until_ready(fwd_tiled(s2, a2))
    exp2 = ref(s2, a2, params)
    assert out2.shape == (B2, 1)
    assert jnp.allclose(out2, exp2, atol=2e-5, rtol=1e-4), (
        float(jnp.max(jnp.abs(out2 - exp2))))

    # --- Test 3: opt-in bf16 compute path (halves HBM traffic of the dominant
    #     streams when the producer supplies bf16; f32 accumulation kept).
    B3 = 64
    s3 = jax.random.normal(jax.random.fold_in(ks, 2), (B3, S), jnp.float32)
    a3 = jax.random.uniform(jax.random.fold_in(ka, 2), (B3, A), jnp.float32,
                            -1.0, 1.0)
    fwd_bf16 = jax.jit(lambda s, a: critic_forward(
        s, a, params, compute_dtype=jnp.bfloat16))
    out3 = jax.block_until_ready(fwd_bf16(s3, a3))
    exp3 = ref(s3, a3, params)
    assert jnp.allclose(out3, exp3, atol=3e-2, rtol=3e-2), (
        float(jnp.max(jnp.abs(out3 - exp3))))

    print("KERNEL_OK")
</pallas_src>

<mosaic_0001>
module attributes {stable_mosaic.version = 11 : i64} {
  func.func @critic_fused_kernel(%arg0: i32, %arg1: memref<50x48xf32, #tpu.memory_space<vmem>>, %arg2: memref<50x4xf32, #tpu.memory_space<vmem>>, %arg3: memref<1x48xf32, #tpu.memory_space<vmem>>, %arg4: memref<1x48xf32, #tpu.memory_space<vmem>>, %arg5: memref<48x128xf32, #tpu.memory_space<vmem>>, %arg6: memref<1x128xf32, #tpu.memory_space<vmem>>, %arg7: memref<128x128xf32, #tpu.memory_space<vmem>>, %arg8: memref<4x128xf32, #tpu.memory_space<vmem>>, %arg9: memref<1x128xf32, #tpu.memory_space<vmem>>, %arg10: memref<1x128xf32, #tpu.memory_space<vmem>>, %arg11: memref<1x1xf32, #tpu.memory_space<smem>>, %arg12: memref<50x1xf32, #tpu.memory_space<vmem>>) attributes {dimension_semantics = [#tpu.dimension_semantics<arbitrary>], iteration_bounds = array<i64: 1>, scalar_prefetch = 0 : i64, scratch_operands = 0 : i64, tpu.core_type = #tpu.core_type<tc>, window_params = [{pipeline_mode = #tpu.pipeline_mode<synchronous>, transform_indices = @transform_0, window_bounds = array<i64: 50, 48>}, {pipeline_mode = #tpu.pipeline_mode<synchronous>, transform_indices = @transform_1, window_bounds = array<i64: 50, 4>}, {pipeline_mode = #tpu.pipeline_mode<synchronous>, transform_indices = @transform_2, window_bounds = array<i64: 1, 48>}, {pipeline_mode = #tpu.pipeline_mode<synchronous>, transform_indices = @transform_3, window_bounds = array<i64: 1, 48>}, {pipeline_mode = #tpu.pipeline_mode<synchronous>, transform_indices = @transform_4, window_bounds = array<i64: 48, 128>}, {pipeline_mode = #tpu.pipeline_mode<synchronous>, transform_indices = @transform_5, window_bounds = array<i64: 1, 128>}, {pipeline_mode = #tpu.pipeline_mode<synchronous>, transform_indices = @transform_6, window_bounds = array<i64: 128, 128>}, {pipeline_mode = #tpu.pipeline_mode<synchronous>, transform_indices = @transform_7, window_bounds = array<i64: 4, 128>}, {pipeline_mode = #tpu.pipeline_mode<synchronous>, transform_indices = @transform_8, window_bounds = array<i64: 1, 128>}, {pipeline_mode = #tpu.pipeline_mode<synchronous>, transform_indices = @transform_9, window_bounds = array<i64: 1, 128>}, {transform_indices = @transform_10, window_bounds = array<i64: 1, 1>}, {pipeline_mode = #tpu.pipeline_mode<synchronous>, transform_indices = @transform_11, window_bounds = array<i64: 50, 1>}]} {
    %c0 = arith.constant 0 : index
    %c0_0 = arith.constant 0 : index
    %0 = vector.load %arg1[%c0, %c0_0] : memref<50x48xf32, #tpu.memory_space<vmem>>, vector<50x48xf32>
    %c0_1 = arith.constant 0 : index
    %c0_2 = arith.constant 0 : index
    %1 = vector.load %arg2[%c0_1, %c0_2] : memref<50x4xf32, #tpu.memory_space<vmem>>, vector<50x4xf32>
    %cst = arith.constant dense<0.000000e+00> : vector<48xf32>
    %2 = vector.multi_reduction <add>, %0, %cst [0] : vector<50x48xf32> to vector<48xf32>
    %3 = vector.shape_cast %2 : vector<48xf32> to vector<1x48xf32>
    %cst_3 = arith.constant 5.000000e+01 : f32
    %4 = vector.broadcast %cst_3 : f32 to vector<1x48xf32>
    %5 = arith.divf %3, %4 : vector<1x48xf32>
    %6 = vector.broadcast %5 : vector<1x48xf32> to vector<50x48xf32>
    %7 = arith.subf %0, %6 : vector<50x48xf32>
    %8 = arith.mulf %7, %7 : vector<50x48xf32>
    %cst_4 = arith.constant dense<0.000000e+00> : vector<48xf32>
    %9 = vector.multi_reduction <add>, %8, %cst_4 [0] : vector<50x48xf32> to vector<48xf32>
    %10 = vector.shape_cast %9 : vector<48xf32> to vector<1x48xf32>
    %cst_5 = arith.constant 5.000000e+01 : f32
    %11 = vector.broadcast %cst_5 : f32 to vector<1x48xf32>
    %12 = arith.divf %10, %11 : vector<1x48xf32>
    %c0_6 = arith.constant 0 : index
    %c0_7 = arith.constant 0 : index
    %13 = vector.load %arg3[%c0_6, %c0_7] : memref<1x48xf32, #tpu.memory_space<vmem>>, vector<1x48xf32>
    %c0_8 = arith.constant 0 : index
    %c0_9 = arith.constant 0 : index
    %14 = vector.load %arg4[%c0_8, %c0_9] : memref<1x48xf32, #tpu.memory_space<vmem>>, vector<1x48xf32>
    %c0_10 = arith.constant 0 : index
    %c0_11 = arith.constant 0 : index
    %15 = vector.load %arg5[%c0_10, %c0_11] : memref<48x128xf32, #tpu.memory_space<vmem>>, vector<48x128xf32>
    %c0_12 = arith.constant 0 : index
    %c0_13 = arith.constant 0 : index
    %16 = vector.load %arg6[%c0_12, %c0_13] : memref<1x128xf32, #tpu.memory_space<vmem>>, vector<1x128xf32>
    %c0_14 = arith.constant 0 : index
    %c0_15 = arith.constant 0 : index
    %17 = vector.load %arg7[%c0_14, %c0_15] : memref<128x128xf32, #tpu.memory_space<vmem>>, vector<128x128xf32>
    %c0_16 = arith.constant 0 : index
    %c0_17 = arith.constant 0 : index
    %18 = vector.load %arg8[%c0_16, %c0_17] : memref<4x128xf32, #tpu.memory_space<vmem>>, vector<4x128xf32>
    %c0_18 = arith.constant 0 : index
    %c0_19 = arith.constant 0 : index
    %19 = vector.load %arg9[%c0_18, %c0_19] : memref<1x128xf32, #tpu.memory_space<vmem>>, vector<1x128xf32>
    %c0_20 = arith.constant 0 : index
    %c0_21 = arith.constant 0 : index
    %20 = vector.load %arg10[%c0_20, %c0_21] : memref<1x128xf32, #tpu.memory_space<vmem>>, vector<1x128xf32>
    %c0_22 = arith.constant 0 : index
    %c0_23 = arith.constant 0 : index
    %21 = memref.load %arg11[%c0_22, %c0_23] : memref<1x1xf32, #tpu.memory_space<smem>>
    %cst_24 = arith.constant 9.99999974E-6 : f32
    %22 = vector.broadcast %cst_24 : f32 to vector<1x48xf32>
    %23 = arith.addf %12, %22 : vector<1x48xf32>
    %24 = math.rsqrt %23 : vector<1x48xf32>
    %25 = arith.mulf %13, %24 : vector<1x48xf32>
    %26 = arith.mulf %5, %25 : vector<1x48xf32>
    %27 = arith.subf %14, %26 : vector<1x48xf32>
    %28 = vector.broadcast %25 : vector<1x48xf32> to vector<50x48xf32>
    %29 = arith.mulf %0, %28 : vector<50x48xf32>
    %30 = vector.broadcast %27 : vector<1x48xf32> to vector<50x48xf32>
    %31 = arith.addf %29, %30 : vector<50x48xf32>
    %cst_25 = arith.constant dense<0.000000e+00> : vector<50x128xf32>
    %32 = tpu.matmul %31, %15, %cst_25 {dimension_numbers = #tpu.dot_dimension_numbers<[1], [0], [0], [1], [0, 0, 1, 1], [], []>} : vector<50x48xf32>, vector<48x128xf32>, vector<50x128xf32> -> vector<50x128xf32>
    %33 = vector.broadcast %16 : vector<1x128xf32> to vector<50x128xf32>
    %34 = arith.addf %32, %33 : vector<50x128xf32>
    %cst_26 = arith.constant 0.000000e+00 : f32
    %35 = vector.broadcast %cst_26 : f32 to vector<50x128xf32>
    %36 = arith.cmpf ogt, %34, %35 : vector<50x128xf32>
    %cst_27 = arith.constant 0.00999999977 : f32
    %37 = vector.broadcast %cst_27 : f32 to vector<50x128xf32>
    %38 = arith.mulf %37, %34 : vector<50x128xf32>
    %39 = arith.select %36, %34, %38 : vector<50x128xi1>, vector<50x128xf32>
    %cst_28 = arith.constant dense<0.000000e+00> : vector<50x128xf32>
    %40 = tpu.matmul %39, %17, %cst_28 {dimension_numbers = #tpu.dot_dimension_numbers<[1], [0], [0], [1], [0, 0, 1, 1], [], []>} : vector<50x128xf32>, vector<128x128xf32>, vector<50x128xf32> -> vector<50x128xf32>
    %cst_29 = arith.constant dense<0.000000e+00> : vector<50x128xf32>
    %41 = tpu.matmul %1, %18, %cst_29 {dimension_numbers = #tpu.dot_dimension_numbers<[1], [0], [0], [1], [0, 0, 1, 1], [], []>} : vector<50x4xf32>, vector<4x128xf32>, vector<50x128xf32> -> vector<50x128xf32>
    %42 = arith.addf %40, %41 : vector<50x128xf32>
    %43 = vector.broadcast %19 : vector<1x128xf32> to vector<50x128xf32>
    %44 = arith.addf %42, %43 : vector<50x128xf32>
    %cst_30 = arith.constant 0.000000e+00 : f32
    %45 = vector.broadcast %cst_30 : f32 to vector<50x128xf32>
    %46 = arith.cmpf ogt, %44, %45 : vector<50x128xf32>
    %cst_31 = arith.constant 0.00999999977 : f32
    %47 = vector.broadcast %cst_31 : f32 to vector<50x128xf32>
    %48 = arith.mulf %47, %44 : vector<50x128xf32>
    %49 = arith.select %46, %44, %48 : vector<50x128xi1>, vector<50x128xf32>
    %50 = vector.broadcast %20 : vector<1x128xf32> to vector<50x128xf32>
    %51 = arith.mulf %49, %50 : vector<50x128xf32>
    %cst_32 = arith.constant dense<0.000000e+00> : vector<50xf32>
    %52 = vector.multi_reduction <add>, %51, %cst_32 [1] : vector<50x128xf32> to vector<50xf32>
    %53 = vector.shape_cast %52 : vector<50xf32> to vector<50x1xf32>
    %54 = vector.broadcast %21 : f32 to vector<50x1xf32>
    %55 = arith.addf %53, %54 : vector<50x1xf32>
    %c0_33 = arith.constant 0 : index
    %c0_34 = arith.constant 0 : index
    %56 = vector.load %arg12[%c0_33, %c0_34] : memref<50x1xf32, #tpu.memory_space<vmem>>, vector<50x1xf32>
    tpu.vector_store %arg12[%c0_33, %c0_34], %55 {strides = array<i32>} : memref<50x1xf32, #tpu.memory_space<vmem>>, vector<50x1xf32>,
    return
  }
  func.func @transform_0(%arg0: i32) -> (i32, i32) {
    %c0_i32 = arith.constant 0 : i32
    %c0_i32_0 = arith.constant 0 : i32
    %c0_i32_1 = arith.constant 0 : i32
    return %c0_i32, %c0_i32_0 : i32, i32
  }
  func.func @transform_1(%arg0: i32) -> (i32, i32) {
    %c0_i32 = arith.constant 0 : i32
    %c0_i32_0 = arith.constant 0 : i32
    %c0_i32_1 = arith.constant 0 : i32
    return %c0_i32, %c0_i32_0 : i32, i32
  }
  func.func @transform_2(%arg0: i32) -> (i32, i32) {
    %c0_i32 = arith.constant 0 : i32
    %c0_i32_0 = arith.constant 0 : i32
    %c0_i32_1 = arith.constant 0 : i32
    return %c0_i32, %c0_i32_0 : i32, i32
  }
  func.func @transform_3(%arg0: i32) -> (i32, i32) {
    %c0_i32 = arith.constant 0 : i32
    %c0_i32_0 = arith.constant 0 : i32
    %c0_i32_1 = arith.constant 0 : i32
    return %c0_i32, %c0_i32_0 : i32, i32
  }
  func.func @transform_4(%arg0: i32) -> (i32, i32) {
    %c0_i32 = arith.constant 0 : i32
    %c0_i32_0 = arith.constant 0 : i32
    %c0_i32_1 = arith.constant 0 : i32
    return %c0_i32, %c0_i32_0 : i32, i32
  }
  func.func @transform_5(%arg0: i32) -> (i32, i32) {
    %c0_i32 = arith.constant 0 : i32
    %c0_i32_0 = arith.constant 0 : i32
    %c0_i32_1 = arith.constant 0 : i32
    return %c0_i32, %c0_i32_0 : i32, i32
  }
  func.func @transform_6(%arg0: i32) -> (i32, i32) {
    %c0_i32 = arith.constant 0 : i32
    %c0_i32_0 = arith.constant 0 : i32
    %c0_i32_1 = arith.constant 0 : i32
    return %c0_i32, %c0_i32_0 : i32, i32
  }
  func.func @transform_7(%arg0: i32) -> (i32, i32) {
    %c0_i32 = arith.constant 0 : i32
    %c0_i32_0 = arith.constant 0 : i32
    %c0_i32_1 = arith.constant 0 : i32
    return %c0_i32, %c0_i32_0 : i32, i32
  }
  func.func @transform_8(%arg0: i32) -> (i32, i32) {
    %c0_i32 = arith.constant 0 : i32
    %c0_i32_0 = arith.constant 0 : i32
    %c0_i32_1 = arith.constant 0 : i32
    return %c0_i32, %c0_i32_0 : i32, i32
  }
  func.func @transform_9(%arg0: i32) -> (i32, i32) {
    %c0_i32 = arith.constant 0 : i32
    %c0_i32_0 = arith.constant 0 : i32
    %c0_i32_1 = arith.constant 0 : i32
    return %c0_i32, %c0_i32_0 : i32, i32
  }
  func.func @transform_10(%arg0: i32) -> (i32, i32) {
    %c0_i32 = arith.constant 0 : i32
    %c0_i32_0 = arith.constant 0 : i32
    %c0_i32_1 = arith.constant 0 : i32
    return %c0_i32, %c0_i32_0 : i32, i32
  }
  func.func @transform_11(%arg0: i32) -> (i32, i32) {
    %c0_i32 = arith.constant 0 : i32
    %c0_i32_0 = arith.constant 0 : i32
    %c0_i32_1 = arith.constant 0 : i32
    return %c0_i32, %c0_i32_0 : i32, i32
  }
}

</mosaic_0001>

<llo_original>
// kernel: _lambda_.1
$region0: #{_lambda_.1}
  #allocation0 [shape = 'u32[]', space=smem, size = 0x4, offset = 0x4, fixed_abs, tag = 'smem constant byte address 0x4 - core index']
  #allocation1 [shape = 'u32[72,128]{1,0:T(1,128)}', space=vmem, size = 0x9000, scoped, tag = 'internal scratch']
  #allocation2 [shape = 'f32[1,1]{1,0:T(1,128)S(6)}', space=smem, size = 0x200, scoped, tag = 'scoped memory for _lambda_.1']
  %s0 = inlined_call_operand.vmem [shape: f32[50,48], index: 0, kind: input, shape index: {}]
  %s1 = inlined_call_operand.vmem [shape: f32[50,4], index: 1, kind: input, shape index: {}]
  %s2 = inlined_call_operand.vmem [shape: f32[1,48], index: 2, kind: input, shape index: {}]
  %s3 = inlined_call_operand.vmem [shape: f32[1,48], index: 3, kind: input, shape index: {}]
  %s4 = inlined_call_operand.hbm [shape: f32[48,128], index: 4, kind: input, shape index: {}]
  %s5 = inlined_call_operand.vmem [shape: f32[1,128], index: 5, kind: input, shape index: {}]
  %s6 = inlined_call_operand.vmem [shape: f32[128,128], index: 6, kind: input, shape index: {}]
  %s7 = inlined_call_operand.vmem [shape: f32[4,128], index: 7, kind: input, shape index: {}]
  %s8 = inlined_call_operand.vmem [shape: f32[1,128], index: 8, kind: input, shape index: {}]
  %s9 = inlined_call_operand.vmem [shape: f32[1,128], index: 9, kind: input, shape index: {}]
  %s10 = inlined_call_operand.<no memory space> [shape: f32[1,1], index: 10, kind: input, shape index: {}]
  %s11 = inlined_call_operand.vmem [shape: f32[50,1], index: 11, kind: output, shape index: {}]
  %s12 = sld [smem:[#allocation0]]
  $region58: #{_lambda_.1} parent=0
    _
  %s14 = ssub.s32 1, %s12
  %s15 = scalar_select 0, %s14, %s12
  %16 = sst [smem:[#allocation2]] %s10
  $region1: #{_lambda_.1} parent=0
    #allocation3 [shape = 'u8[24576]{0}', space=vmem, size = 0x6000, scoped, tag = 'input window, operand 4, single buffered']
    #allocation4 [shape = 's32[1]{0}', space=sflag, size = 0x4, scoped, tag = 'scoped memory for _lambda_.1']
    %17 = vsyncpa [#allocation4], 0
    // Predicated region
    $region2: #{_lambda_.1} parent=1 // pred_check
      _
    $region3: #{_lambda_.1} parent=1 // pred_check_branch
      %19 = sbr.rel (0) target = $region5
    $region4: #{_lambda_.1} parent=1 // pred_region
      _
    $region5: #{_lambda_.1} parent=1 // pred_fallthru
      _
    // Predicated region
    $region6: #{_lambda_.1} parent=1 // pred_check
      _
    $region7: #{_lambda_.1} parent=1 // pred_check_branch
      %21 = sbr.rel (0) target = $region9
    $region8: #{_lambda_.1} parent=1 // pred_region
      _
    $region9: #{_lambda_.1} parent=1 // pred_fallthru
      _
    // Predicated region
    $region10: #{_lambda_.1} parent=1 // pred_check
      _
    $region11: #{_lambda_.1} parent=1 // pred_check_branch
      %23 = sbr.rel (0) target = $region13
    $region12: #{_lambda_.1} parent=1 // pred_region
      _
    $region13: #{_lambda_.1} parent=1 // pred_fallthru
      _
    // Predicated region
    $region14: #{_lambda_.1} parent=1 // pred_check
      _
    $region15: #{_lambda_.1} parent=1 // pred_check_branch
      %25 = sbr.rel (0) target = $region17
    $region16: #{_lambda_.1} parent=1 // pred_region
      _
    $region17: #{_lambda_.1} parent=1 // pred_fallthru
      _
    // Predicated region
    $region18: #{_lambda_.1} parent=1 // pred_check
      _
    $region19: #{_lambda_.1} parent=1 // pred_check_branch
      %27 = sbr.rel (0) target = $region21
    $region20: #{_lambda_.1} parent=1 // pred_region
      %29 = vsyncadd [#allocation4], 0
      %s30 = sshll.u32 %s4, 4
      %s31 = int_to_ptr.hbm [resolvable:$true] %s30
      %s32 = sshll.u32 [#allocation3], 4
      %s33 = int_to_ptr.vmem [resolvable:$true] %s32
      %38 = dma.hbm_to_vmem [thread:$0]  %s31, 768, %s33, [#allocation4], 128, 128, 8
    $region21: #{_lambda_.1} parent=1 // pred_fallthru
      _
    // Predicated region
    $region22: #{_lambda_.1} parent=1 // pred_check
      _
    $region23: #{_lambda_.1} parent=1 // pred_check_branch
      %40 = sbr.rel (0) target = $region25
    $region24: #{_lambda_.1} parent=1 // pred_region
      _
    $region25: #{_lambda_.1} parent=1 // pred_fallthru
      _
    // Predicated region
    $region26: #{_lambda_.1} parent=1 // pred_check
      _
    $region27: #{_lambda_.1} parent=1 // pred_check_branch
      %42 = sbr.rel (0) target = $region29
    $region28: #{_lambda_.1} parent=1 // pred_region
      _
    $region29: #{_lambda_.1} parent=1 // pred_fallthru
      _
    // Predicated region
    $region30: #{_lambda_.1} parent=1 // pred_check
      _
    $region31: #{_lambda_.1} parent=1 // pred_check_branch
      %44 = sbr.rel (0) target = $region33
    $region32: #{_lambda_.1} parent=1 // pred_region
      _
    $region33: #{_lambda_.1} parent=1 // pred_fallthru
      _
    // Predicated region
    $region34: #{_lambda_.1} parent=1 // pred_check
      _
    $region35: #{_lambda_.1} parent=1 // pred_check_branch
      %46 = sbr.rel (0) target = $region37
    $region36: #{_lambda_.1} parent=1 // pred_region
      _
    $region37: #{_lambda_.1} parent=1 // pred_fallthru
      _
    // Predicated region
    $region38: #{_lambda_.1} parent=1 // pred_check
      _
    $region39: #{_lambda_.1} parent=1 // pred_check_branch
      %48 = sbr.rel (0) target = $region41
    $region40: #{_lambda_.1} parent=1 // pred_region
      _
    $region41: #{_lambda_.1} parent=1 // pred_fallthru
      _
    // Predicated region
    $region42: #{_lambda_.1} parent=1 // pred_check
      _
    $region43: #{_lambda_.1} parent=1 // pred_check_branch
      %50 = sbr.rel (0) target = $region45
    $region44: #{_lambda_.1} parent=1 // pred_region
      _
    $region45: #{_lambda_.1} parent=1 // pred_fallthru
      _
    // Predicated region
    $region46: #{_lambda_.1} parent=1 // pred_check
      _
    $region47: #{_lambda_.1} parent=1 // pred_check_branch
      %52 = sbr.rel (0) target = $region49
    $region48: #{_lambda_.1} parent=1 // pred_region
      %54 = dma.done [#allocation4], 768
    $region49: #{_lambda_.1} parent=1 // pred_fallthru
      _
    %v55 = vld [vmem:[%s0] sm:$0xff]
    %v56 = vld [vmem:[%s0 + $0x8] sm:$0xff]
    %v57 = vld [vmem:[%s0 + $0x10] sm:$0xff]
    %v58 = vld [vmem:[%s0 + $0x18] sm:$0xff]
    %v59 = vld [vmem:[%s0 + $0x20] sm:$0xff]
    %v60 = vld [vmem:[%s0 + $0x28] sm:$0xff]
    %v61 = vld [vmem:[%s0 + $0x30] sm:$0x3]
    %v62 = vld [vmem:[%s1] sm:$0xff]
    %v63 = vld [vmem:[%s1 + $0x8] sm:$0xff]
    %v64 = vld [vmem:[%s1 + $0x10] sm:$0xff]
    %v65 = vld [vmem:[%s1 + $0x18] sm:$0xff]
    %v66 = vld [vmem:[%s1 + $0x20] sm:$0xff]
    %v67 = vld [vmem:[%s1 + $0x28] sm:$0xff]
    %v68 = vld [vmem:[%s1 + $0x30] sm:$0x3]
    %vm69 = vcmask 392192
    %v70 = vsel %vm69, %v55, 0.0
    %v71 = vsel %vm69, %v56, 0.0
    %v72 = vadd.f32 %v70, %v71
    %v73 = vsel %vm69, %v57, 0.0
    %v74 = vadd.f32 %v72, %v73
    %v75 = vsel %vm69, %v58, 0.0
    %v76 = vadd.f32 %v74, %v75
    %v77 = vsel %vm69, %v59, 0.0
    %v78 = vadd.f32 %v76, %v77
    %v79 = vsel %vm69, %v60, 0.0
    %v80 = vadd.f32 %v78, %v79
    %vm81 = vcmask 386048
    %v82 = vsel %vm81, %v61, 0.0
    %v83 = vadd.f32 %v80, %v82
    %v84 = vrot.slane %v83, 4
    %v85 = vadd.f32 %v83, %v84
    %v86 = vrot.slane %v85, 2
    %v87 = vadd.f32 %v85, %v86
    %v88 = vrot.slane %v87, 1
    %v89 = vadd.f32 %v87, %v88
    %v90 = vrcp.pop 50.0
    %v91 = vmul.f32 50.0, %v90
    %v92 = vsub.f32 1.0, %v91
    %v93 = vmul.f32 %v90, %v92
    %v94 = vadd.f32 %v90, %v93
    %vm95 = vweird.f32 %v90
    %v96 = vsel %vm95, %v90, %v94
    %v97 = vmul.f32 %v89, %v96
    %v98 = vsub.f32 %v55, %v97
    %v99 = vsub.f32 %v56, %v97
    %v100 = vsub.f32 %v57, %v97
    %v101 = vsub.f32 %v58, %v97
    %v102 = vsub.f32 %v59, %v97
    %v103 = vsub.f32 %v60, %v97
    %v104 = vsub.f32 %v61, %v97
    %v105 = vmul.f32 %v98, %v98
    %v106 = vmul.f32 %v99, %v99
    %v107 = vmul.f32 %v100, %v100
    %v108 = vmul.f32 %v101, %v101
    %v109 = vmul.f32 %v102, %v102
    %v110 = vmul.f32 %v103, %v103
    %v111 = vmul.f32 %v104, %v104
    %v112 = vsel %vm69, %v105, 0.0
    %v113 = vsel %vm69, %v106, 0.0
    %v114 = vadd.f32 %v112, %v113
    %v115 = vsel %vm69, %v107, 0.0
    %v116 = vadd.f32 %v114, %v115
    %v117 = vsel %vm69, %v108, 0.0
    %v118 = vadd.f32 %v116, %v117
    %v119 = vsel %vm69, %v109, 0.0
    %v120 = vadd.f32 %v118, %v119
    %v121 = vsel %vm69, %v110, 0.0
    %v122 = vadd.f32 %v120, %v121
    %v123 = vsel %vm81, %v111, 0.0
    %v124 = vadd.f32 %v122, %v123
    %v125 = vrot.slane %v124, 4
    %v126 = vadd.f32 %v124, %v125
    %v127 = vrot.slane %v126, 2
    %v128 = vadd.f32 %v126, %v127
    %v129 = vrot.slane %v128, 1
    %v130 = vadd.f32 %v128, %v129
    %v131 = vmul.f32 %v130, %v96
    %v132 = vld [vmem:[%s2] sm:$0x1]
    %v133 = vld [vmem:[%s3] sm:$0x1]
    %v134 = vld [vmem:[#allocation3] sm:$0xff]
    %v135 = vld [vmem:[#allocation3 + $0x8] sm:$0xff]
    %v136 = vld [vmem:[#allocation3 + $0x10] sm:$0xff]
    %v137 = vld [vmem:[#allocation3 + $0x18] sm:$0xff]
    %v138 = vld [vmem:[#allocation3 + $0x20] sm:$0xff]
    %v139 = vld [vmem:[#allocation3 + $0x28] sm:$0xff]
    %v140 = vld [vmem:[%s5] sm:$0x1]
    %v141 = vld [vmem:[%s6] sm:$0xff]
    %v142 = vld [vmem:[%s6 + $0x8] sm:$0xff]
    %v143 = vld [vmem:[%s6 + $0x10] sm:$0xff]
    %v144 = vld [vmem:[%s6 + $0x18] sm:$0xff]
    %v145 = vld [vmem:[%s6 + $0x20] sm:$0xff]
    %v146 = vld [vmem:[%s6 + $0x28] sm:$0xff]
    %v147 = vld [vmem:[%s6 + $0x30] sm:$0xff]
    %v148 = vld [vmem:[%s6 + $0x38] sm:$0xff]
    %v149 = vld [vmem:[%s6 + $0x40] sm:$0xff]
    %v150 = vld [vmem:[%s6 + $0x48] sm:$0xff]
    %v151 = vld [vmem:[%s6 + $0x50] sm:$0xff]
    %v152 = vld [vmem:[%s6 + $0x58] sm:$0xff]
    %v153 = vld [vmem:[%s6 + $0x60] sm:$0xff]
    %v154 = vld [vmem:[%s6 + $0x68] sm:$0xff]
    %v155 = vld [vmem:[%s6 + $0x70] sm:$0xff]
    %v156 = vld [vmem:[%s6 + $0x78] sm:$0xff]
    %v157 = vld [vmem:[%s7] sm:$0xf]
    %v158 = vld [vmem:[%s8] sm:$0x1]
    %v159 = vld [vmem:[%s9] sm:$0x1]
    %s160 = sld [smem:[#allocation2]]
    %v161 = vadd.f32 %v131, 1e-05
    %v162 = vrsqrt.pop %v161
    %v163 = vmul.f32 %v162, %v161
    %v164 = vmul.f32 %v163, %v162
    %v165 = vmul.f32 0.5, %v164
    %v166 = vsub.f32 1.5, %v165
    %v167 = vmul.f32 %v162, %v166
    %vm168 = vweird.f32 %v161
    %vm169 = vweird.f32 %v162
    %vm170 = vmor %vm168, %vm169
    %v171 = vsel %vm170, %v162, %v167
    %v172 = vmul.f32 %v132, %v171
    %v173 = vmul.f32 %v97, %v172
    %v174 = vsub.f32 %v133, %v173
    %v176 = vperm.slane %v172, 0
    %v178 = vmul.f32 %v55, %v176
    %v179 = vmul.f32 %v56, %v176
    %v180 = vmul.f32 %v57, %v176
    %v181 = vmul.f32 %v58, %v176
    %v182 = vmul.f32 %v59, %v176
    %v183 = vmul.f32 %v60, %v176
    %v184 = vmul.f32 %v61, %v176
    %v186 = vperm.slane %v174, 0
    %v188 = vadd.f32 %v178, %v186
    %v189 = vadd.f32 %v179, %v186
    %v190 = vadd.f32 %v180, %v186
    %v191 = vadd.f32 %v181, %v186
    %v192 = vadd.f32 %v182, %v186
    %v193 = vadd.f32 %v183, %v186
    %v194 = vadd.f32 %v184, %v186
    %v196 = vperm.slane %v140, 0
    %v199 = vsel %vm69, %v188, 0
    %v202 = vsel %vm69, %v189, 0
    %v205 = vsel %vm69, %v190, 0
    %v208 = vsel %vm69, %v191, 0
    %v211 = vsel %vm69, %v192, 0
    %v214 = vsel %vm69, %v193, 0
    %v217 = vsel %vm69, %v194, 0
    %219 = vmatpush.msra.mxu0 0.0
    %220 = vmatpush.msra.mxu0 0.0
    %221 = vmatpush.msra.mxu0 0.0
    %222 = vmatpush.msra.mxu0 0.0
    %223 = vmatpush.msra.mxu0 0.0
    %224 = vmatpush.msra.mxu0 0.0
    %225 = vmatpush.msra.mxu0 0.0
    %226 = vmatpush.msra.mxu0 0.0
    %227 = vmatpush.msra.mxu0 0.0
    %228 = vmatpush.msra.mxu0 0.0
    %229 = vmatpush.msra.mxu0 %v139
    %230 = vmatpush.msra.mxu0 %v138
    %231 = vmatpush.msra.mxu0 %v137
    %232 = vmatpush.msra.mxu0 %v136
    %233 = vmatpush.msra.mxu0 %v135
    %234 = vmatpush.msra.mxu0 %v134
    %235 = vmatmul.f32.gmra.mxu0 %v199
    %v236 = vpop.f32.mrf.mxu0
    %v237 = vadd.f32 %v196, %v236
    %238 = vmatmul.f32.gmra.mxu0 %v202
    %v239 = vpop.f32.mrf.mxu0
    %v240 = vadd.f32 %v196, %v239
    %241 = vmatmul.f32.gmra.mxu0 %v205
    %v242 = vpop.f32.mrf.mxu0
    %v243 = vadd.f32 %v196, %v242
    %244 = vmatmul.f32.gmra.mxu0 %v208
    %v245 = vpop.f32.mrf.mxu0
    %v246 = vadd.f32 %v196, %v245
    %247 = vmatmul.f32.gmra.mxu0 %v211
    %v248 = vpop.f32.mrf.mxu0
    %v249 = vadd.f32 %v196, %v248
    %250 = vmatmul.f32.gmra.mxu0 %v214
    %v251 = vpop.f32.mrf.mxu0
    %v252 = vadd.f32 %v196, %v251
    %253 = vmatmul.f32.gmra.mxu0 %v217
    %v254 = vpop.f32.mrf.mxu0
    %v255 = vadd.f32 %v196, %v254
    %256 = vdwg.mxu0
    %vm257 = vcmp.gt.f32.partialorder %v237, 0.0
    %vm258 = vcmp.gt.f32.partialorder %v240, 0.0
    %vm259 = vcmp.gt.f32.partialorder %v243, 0.0
    %vm260 = vcmp.gt.f32.partialorder %v246, 0.0
    %vm261 = vcmp.gt.f32.partialorder %v249, 0.0
    %vm262 = vcmp.gt.f32.partialorder %v252, 0.0
    %vm263 = vcmp.gt.f32.partialorder %v255, 0.0
    %v264 = vmul.f32 %v237, 0.01
    %v265 = vmul.f32 %v240, 0.01
    %v266 = vmul.f32 %v243, 0.01
    %v267 = vmul.f32 %v246, 0.01
    %v268 = vmul.f32 %v249, 0.01
    %v269 = vmul.f32 %v252, 0.01
    %v270 = vmul.f32 %v255, 0.01
    %v271 = vsel %vm257, %v237, %v264
    %v272 = vsel %vm258, %v240, %v265
    %v273 = vsel %vm259, %v243, %v266
    %v274 = vsel %vm260, %v246, %v267
    %v275 = vsel %vm261, %v249, %v268
    %v276 = vsel %vm262, %v252, %v269
    %v277 = vsel %vm263, %v255, %v270
    %vm278 = vcmask 31744
    %v280 = vsel %vm278, %v62, 0
    %v283 = vsel %vm278, %v63, 0
    %v286 = vsel %vm278, %v64, 0
    %v289 = vsel %vm278, %v65, 0
    %v292 = vsel %vm278, %v66, 0
    %v295 = vsel %vm278, %v67, 0
    %v298 = vsel %vm278, %v68, 0
    %vm300 = vcmask 1043456
    %v302 = vsel %vm300, %v157, 0
    %304 = vmatpush.msra.mxu0 0.0
    %305 = vmatpush.msra.mxu0 0.0
    %306 = vmatpush.msra.mxu0 0.0
    %307 = vmatpush.msra.mxu0 0.0
    %308 = vmatpush.msra.mxu0 0.0
    %309 = vmatpush.msra.mxu0 0.0
    %310 = vmatpush.msra.mxu0 0.0
    %311 = vmatpush.msra.mxu0 0.0
    %312 = vmatpush.msra.mxu0 0.0
    %313 = vmatpush.msra.mxu0 0.0
    %314 = vmatpush.msra.mxu0 0.0
    %315 = vmatpush.msra.mxu0 0.0
    %316 = vmatpush.msra.mxu0 0.0
    %317 = vmatpush.msra.mxu0 0.0
    %318 = vmatpush.msra.mxu0 0.0
    %319 = vmatpush.msra.mxu0 %v302
    %320 = vmatmul.f32.gmra.mxu0 %v280
    %v321 = vpop.f32.mrf.mxu0
    %v322 = vadd.f32 0.0, %v321
    %323 = vmatmul.f32.gmra.mxu0 %v283
    %v324 = vpop.f32.mrf.mxu0
    %v325 = vadd.f32 0.0, %v324
    %326 = vmatmul.f32.gmra.mxu0 %v286
    %v327 = vpop.f32.mrf.mxu0
    %v328 = vadd.f32 0.0, %v327
    %329 = vmatmul.f32.gmra.mxu0 %v289
    %v330 = vpop.f32.mrf.mxu0
    %v331 = vadd.f32 0.0, %v330
    %332 = vmatmul.f32.gmra.mxu0 %v292
    %v333 = vpop.f32.mrf.mxu0
    %v334 = vadd.f32 0.0, %v333
    %335 = vmatmul.f32.gmra.mxu0 %v295
    %v336 = vpop.f32.mrf.mxu0
    %v337 = vadd.f32 0.0, %v336
    %338 = vmatmul.f32.gmra.mxu0 %v298
    %v339 = vpop.f32.mrf.mxu0
    %v340 = vadd.f32 0.0, %v339
    %341 = vdwg.mxu0
    %342 = vmatpush.msra.mxu0 %v156
    %343 = vmatpush.msra.mxu0 %v155
    %344 = vmatpush.msra.mxu0 %v154
    %345 = vmatpush.msra.mxu0 %v153
    %346 = vmatpush.msra.mxu0 %v152
    %347 = vmatpush.msra.mxu0 %v151
    %348 = vmatpush.msra.mxu0 %v150
    %349 = vmatpush.msra.mxu0 %v149
    %350 = vmatpush.msra.mxu0 %v148
    %351 = vmatpush.msra.mxu0 %v147
    %352 = vmatpush.msra.mxu0 %v146
    %353 = vmatpush.msra.mxu0 %v145
    %354 = vmatpush.msra.mxu0 %v144
    %355 = vmatpush.msra.mxu0 %v143
    %356 = vmatpush.msra.mxu0 %v142
    %357 = vmatpush.msra.mxu0 %v141
    %358 = vmatmul.f32.gmra.mxu0 %v271
    %v359 = vpop.f32.mrf.mxu0
    %v360 = vadd.f32 %v322, %v359
    %361 = vmatmul.f32.gmra.mxu0 %v272
    %v362 = vpop.f32.mrf.mxu0
    %v363 = vadd.f32 %v325, %v362
    %364 = vmatmul.f32.gmra.mxu0 %v273
    %v365 = vpop.f32.mrf.mxu0
    %v366 = vadd.f32 %v328, %v365
    %367 = vmatmul.f32.gmra.mxu0 %v274
    %v368 = vpop.f32.mrf.mxu0
    %v369 = vadd.f32 %v331, %v368
    %370 = vmatmul.f32.gmra.mxu0 %v275
    %v371 = vpop.f32.mrf.mxu0
    %v372 = vadd.f32 %v334, %v371
    %373 = vmatmul.f32.gmra.mxu0 %v276
    %v374 = vpop.f32.mrf.mxu0
    %v375 = vadd.f32 %v337, %v374
    %376 = vmatmul.f32.gmra.mxu0 %v277
    %v377 = vpop.f32.mrf.mxu0
    %v378 = vadd.f32 %v340, %v377
    %379 = vdwg.mxu0
    %v381 = vperm.slane %v158, 0
    %v383 = vadd.f32 %v360, %v381
    %v384 = vadd.f32 %v363, %v381
    %v385 = vadd.f32 %v366, %v381
    %v386 = vadd.f32 %v369, %v381
    %v387 = vadd.f32 %v372, %v381
    %v388 = vadd.f32 %v375, %v381
    %v389 = vadd.f32 %v378, %v381
    %vm390 = vcmp.gt.f32.partialorder %v383, 0.0
    %vm391 = vcmp.gt.f32.partialorder %v384, 0.0
    %vm392 = vcmp.gt.f32.partialorder %v385, 0.0
    %vm393 = vcmp.gt.f32.partialorder %v386, 0.0
    %vm394 = vcmp.gt.f32.partialorder %v387, 0.0
    %vm395 = vcmp.gt.f32.partialorder %v388, 0.0
    %vm396 = vcmp.gt.f32.partialorder %v389, 0.0
    %v397 = vmul.f32 %v383, 0.01
    %v398 = vmul.f32 %v384, 0.01
    %v399 = vmul.f32 %v385, 0.01
    %v400 = vmul.f32 %v386, 0.01
    %v401 = vmul.f32 %v387, 0.01
    %v402 = vmul.f32 %v388, 0.01
    %v403 = vmul.f32 %v389, 0.01
    %v404 = vsel %vm390, %v383, %v397
    %v405 = vsel %vm391, %v384, %v398
    %v406 = vsel %vm392, %v385, %v399
    %v407 = vsel %vm393, %v386, %v400
    %v408 = vsel %vm394, %v387, %v401
    %v409 = vsel %vm395, %v388, %v402
    %v410 = vsel %vm396, %v389, %v403
    %v412 = vperm.slane %v159, 0
    %v414 = vmul.f32 %v404, %v412
    %v415 = vmul.f32 %v405, %v412
    %v416 = vmul.f32 %v406, %v412
    %v417 = vmul.f32 %v407, %v412
    %v418 = vmul.f32 %v408, %v412
    %v419 = vmul.f32 %v409, %v412
    %v420 = vmul.f32 %v410, %v412
    %421 = vadd.xlane.f32.xlu0 %v414
    %v422 = vpop.xlane.xlu0 %421
    %423 = vadd.xlane.f32.xlu0 %v415
    %v424 = vpop.xlane.xlu0 %423
    %425 = vadd.xlane.f32.xlu0 %v416
    %v426 = vpop.xlane.xlu0 %425
    %427 = vadd.xlane.f32.xlu0 %v417
    %v428 = vpop.xlane.xlu0 %427
    %429 = vadd.xlane.f32.xlu0 %v418
    %v430 = vpop.xlane.xlu0 %429
    %431 = vadd.xlane.f32.xlu0 %v419
    %v432 = vpop.xlane.xlu0 %431
    %vm433 = vcmask 1041408
    %v434 = vsel %vm433, %v420, 0.0
    %435 = vadd.xlane.f32.xlu0 %v434
    %v436 = vpop.xlane.xlu0 %435
    %v437 = vstv %s160
    %v438 = vadd.f32 %v422, %v437
    %v439 = vadd.f32 %v424, %v437
    %v440 = vadd.f32 %v426, %v437
    %v441 = vadd.f32 %v428, %v437
    %v442 = vadd.f32 %v430, %v437
    %v443 = vadd.f32 %v432, %v437
    %v444 = vadd.f32 %v436, %v437
    %vm445 = vcmask 7168
    %446 = vst.msk [vmem:[%s11] sm:$0xff] %vm445, %v438
    %447 = vst.msk [vmem:[%s11 + $0x8] sm:$0xff] %vm445, %v439
    %448 = vst.msk [vmem:[%s11 + $0x10] sm:$0xff] %vm445, %v440
    %449 = vst.msk [vmem:[%s11 + $0x18] sm:$0xff] %vm445, %v441
    %450 = vst.msk [vmem:[%s11 + $0x20] sm:$0xff] %vm445, %v442
    %451 = vst.msk [vmem:[%s11 + $0x28] sm:$0xff] %vm445, %v443
    %vm452 = vcmask 1024
    %453 = vst.msk [vmem:[%s11 + $0x30] sm:$0x3] %vm452, %v444
    // Predicated region
    $region50: #{_lambda_.1} parent=1 // pred_check
      _
    $region51: #{_lambda_.1} parent=1 // pred_check_branch
      %455 = sbr.rel (0) target = $region53
    $region52: #{_lambda_.1} parent=1 // pred_region
      _
    $region53: #{_lambda_.1} parent=1 // pred_fallthru
      _
    // Predicated region
    $region54: #{_lambda_.1} parent=1 // pred_check
      _
    $region55: #{_lambda_.1} parent=1 // pred_check_branch
      %457 = sbr.rel (0) target = $region57
    $region56: #{_lambda_.1} parent=1 // pred_region
      _
    $region57: #{_lambda_.1} parent=1 // pred_fallthru
      _
    %458 = vsyncpa [#allocation4], 1

</llo_original>
